<compile_context>
chip_gen: v7x
topology: tpu7x:2x2x1
jax: 0.10.0
libtpu: 0.0.40
codegen_flags: <defaults>
</compile_context>

<pallas_src>
import functools

import jax
import jax.numpy as jnp
from jax.experimental import pallas as pl
from jax.experimental.pallas import tpu as pltpu

P1 = 1           # exponent from module __init__
DROP_P = 0.5     # F.dropout default
_LANES = 128
_SUBLANES = 8


def _pow_dropout_kernel(x_ref, bits_ref, o_ref, *, p1, keep_threshold, scale):
    x = x_ref[...]

    # x ** p1 — trace-time integer-power path (pure VPU work; p1 == 1 is free).
    if isinstance(p1, int):
        e = abs(p1)
        if e == 0:
            xp = jnp.ones_like(x)
        else:
            xp = x
            for _ in range(e - 1):
                xp = xp * x
        if p1 < 0:
            xp = jnp.asarray(1.0, x.dtype) / xp
    else:
        xp = x ** p1

    # Dropout keep-mask: keep iff bits >= drop_p * 2^32 (single VPU compare).
    keep = bits_ref[...] >= jnp.uint32(keep_threshold)
    scaled = xp * jnp.asarray(scale, xp.dtype)
    o_ref[...] = jnp.where(keep, scaled, jnp.zeros_like(scaled)).astype(o_ref.dtype)

    # TODO(synk): torch.randint(0, 9, (1,)) (x3) is computed in the PyTorch
    # forward but never used; it is intentionally not reproduced.


def pow_dropout(x, key, p1=P1, drop_p=DROP_P, *, block_rows=256):
    """x ** p1 followed by dropout(p=drop_p, training=True)."""
    orig_shape = x.shape
    n = x.size

    # Lane-dense layout: flatten, pad to a (rows, 128) slab; rows rounded up to
    # a multiple of the row-block (itself a multiple of 8 sublanes).
    rows = max(1, -(-n // _LANES))
    rows_aligned = -(-rows // _SUBLANES) * _SUBLANES
    blk = min(block_rows, rows_aligned)
    blk = -(-blk // _SUBLANES) * _SUBLANES                 # multiple of 8
    rows_padded = -(-rows_aligned // blk) * blk
    padded = rows_padded * _LANES

    x_flat = jnp.pad(x.reshape(-1), (0, padded - n))
    x2d = x_flat.reshape(rows_padded, _LANES)

    # Portable random bits (works on TPU hardware and in interpret mode);
    # per-element uint32 stream, thresholded inside the kernel.
    bits = jax.random.bits(key, (rows_padded, _LANES), dtype=jnp.uint32)

    keep_threshold = min(int(round(drop_p * 2.0 ** 32)), 2 ** 32 - 1)
    scale = 1.0 / (1.0 - drop_p)

    kernel = functools.partial(
        _pow_dropout_kernel, p1=p1, keep_threshold=keep_threshold, scale=scale)

    grid = (rows_padded // blk,)
    out2d = pl.pallas_call(
        kernel,
        out_shape=jax.ShapeDtypeStruct((rows_padded, _LANES), x.dtype),
        grid=grid,
        in_specs=[
            pl.BlockSpec((blk, _LANES), lambda i: (i, 0)),   # x slab tile
            pl.BlockSpec((blk, _LANES), lambda i: (i, 0)),   # random-bit tile
        ],
        out_specs=pl.BlockSpec((blk, _LANES), lambda i: (i, 0)),
        compiler_params=pltpu.CompilerParams(
            dimension_semantics=("parallel",)),
    )(x2d, bits)

    return out2d.reshape(-1)[:n].reshape(orig_shape)


if __name__ == "__main__":
    key = jax.random.PRNGKey(0)
    x_key, drop_key = jax.random.split(key)

    # Matches the module's example input: torch.randn(1, 2, 2)
    x1 = jax.random.normal(x_key, (1, 2, 2), dtype=jnp.float32)

    out = pow_dropout(x1, drop_key)
    jax.block_until_ready(out)

    assert out.shape == (1, 2, 2)
    assert out.dtype == jnp.float32
    # Every output element is either 0 (dropped) or 2 * x (kept, scaled).
    x_np = jax.device_get(x1)
    o_np = jax.device_get(out)
    ok = (abs(o_np) < 1e-6) | (abs(o_np - 2.0 * x_np) < 1e-5)
    assert bool(ok.all())
    print("KERNEL_OK")
</pallas_src>

<mosaic_0001>
module attributes {stable_mosaic.version = 11 : i64} {
  func.func @_pow_dropout_kernel(%arg0: i32, %arg1: memref<8x128xf32, #tpu.memory_space<vmem>>, %arg2: memref<8x128xi32, #tpu.memory_space<vmem>>, %arg3: memref<8x128xf32, #tpu.memory_space<vmem>>) attributes {dimension_semantics = [#tpu.dimension_semantics<parallel>], iteration_bounds = array<i64: 1>, scalar_prefetch = 0 : i64, scratch_operands = 0 : i64, tpu.core_type = #tpu.core_type<tc>, window_params = [{transform_indices = @transform_0, window_bounds = array<i64: 8, 128>}, {transform_indices = @transform_1, window_bounds = array<i64: 8, 128>}, {transform_indices = @transform_2, window_bounds = array<i64: 8, 128>}]} {
    %c0 = arith.constant 0 : index
    %c0_0 = arith.constant 0 : index
    %0 = vector.load %arg1[%c0, %c0_0] : memref<8x128xf32, #tpu.memory_space<vmem>>, vector<8x128xf32>
    %c0_1 = arith.constant 0 : index
    %c0_2 = arith.constant 0 : index
    %1 = vector.load %arg2[%c0_1, %c0_2] : memref<8x128xi32, #tpu.memory_space<vmem>>, vector<8x128xi32>
    %c-2147483648_i32 = arith.constant -2147483648 : i32
    %2 = vector.broadcast %c-2147483648_i32 : i32 to vector<8x128xi32>
    %3 = arith.cmpi uge, %1, %2 : vector<8x128xi32>
    %cst = arith.constant 2.000000e+00 : f32
    %4 = vector.broadcast %cst : f32 to vector<8x128xf32>
    %5 = arith.mulf %0, %4 : vector<8x128xf32>
    %cst_3 = arith.constant 0.000000e+00 : f32
    %6 = vector.broadcast %cst_3 : f32 to vector<8x128xf32>
    %7 = arith.select %3, %5, %6 : vector<8x128xi1>, vector<8x128xf32>
    %c0_4 = arith.constant 0 : index
    %c0_5 = arith.constant 0 : index
    %8 = vector.load %arg3[%c0_4, %c0_5] : memref<8x128xf32, #tpu.memory_space<vmem>>, vector<8x128xf32>
    tpu.vector_store %arg3[%c0_4, %c0_5], %7 {strides = array<i32>} : memref<8x128xf32, #tpu.memory_space<vmem>>, vector<8x128xf32>,
    return
  }
  func.func @transform_0(%arg0: i32) -> (i32, i32) {
    %c0_i32 = arith.constant 0 : i32
    %c0_i32_0 = arith.constant 0 : i32
    return %arg0, %c0_i32 : i32, i32
  }
  func.func @transform_1(%arg0: i32) -> (i32, i32) {
    %c0_i32 = arith.constant 0 : i32
    %c0_i32_0 = arith.constant 0 : i32
    return %arg0, %c0_i32 : i32, i32
  }
  func.func @transform_2(%arg0: i32) -> (i32, i32) {
    %c0_i32 = arith.constant 0 : i32
    %c0_i32_0 = arith.constant 0 : i32
    return %arg0, %c0_i32 : i32, i32
  }
}

</mosaic_0001>

<llo_original>
// kernel: tpu_custom_call.1
$region0: #{tpu_custom_call.1}
  #allocation0 [shape = 'u32[]', space=smem, size = 0x4, offset = 0x4, fixed_abs, tag = 'smem constant byte address 0x4 - core index']
  #allocation1 [shape = 'u32[144,128]{1,0:T(1,128)}', space=vmem, size = 0x12000, scoped, tag = 'internal scratch']
  %s0 = inlined_call_operand.hbm [shape: f32[8,128], index: 0, kind: input, shape index: {}]
  %s1 = inlined_call_operand.hbm [shape: u32[8,128], index: 1, kind: input, shape index: {}]
  %s2 = inlined_call_operand.hbm [shape: f32[8,128], index: 2, kind: output, shape index: {}]
  %s3 = sld [smem:[#allocation0]]
  $region26: #{tpu_custom_call.1} parent=0
    _
  %s5 = ssub.s32 1, %s3
  %s6 = scalar_select 0, %s5, %s3
  $region1: #{tpu_custom_call.1} parent=0
    #allocation2 [shape = 'u8[4096]{0}', space=vmem, size = 0x1000, scoped, tag = 'input window, operand 0, single buffered']
    #allocation3 [shape = 's32[1]{0}', space=sflag, size = 0x4, scoped, tag = 'scoped memory for tpu_custom_call.1']
    #allocation4 [shape = 's32[1]{0}', space=sflag, size = 0x4, scoped, tag = 'scoped memory for tpu_custom_call.1']
    #allocation5 [shape = 'u8[4096]{0}', space=vmem, size = 0x1000, scoped, tag = 'input window, operand 1, single buffered']
    #allocation6 [shape = 's32[1]{0}', space=sflag, size = 0x4, scoped, tag = 'scoped memory for tpu_custom_call.1']
    #allocation7 [shape = 'u8[4096]{0}', space=vmem, size = 0x1000, scoped, tag = 'output window, operand 0, single buffered']
    %7 = vsyncpa [#allocation3], 0
    %8 = vsyncpa [#allocation6], 0
    %9 = vsyncpa [#allocation4], 0
    // Predicated region
    $region2: #{tpu_custom_call.1} parent=1 // pred_check
      _
    $region3: #{tpu_custom_call.1} parent=1 // pred_check_branch
      %11 = sbr.rel (0) target = $region5
    $region4: #{tpu_custom_call.1} parent=1 // pred_region
      %s13 = ssub.s32 128, 128
      %14 = vsyncadd [#allocation3], %s13
      %s16 = sshll.u32 [#allocation2], 4
      %s17 = int_to_ptr.vmem [resolvable:$true] %s16
      %19 = dma.hbm_to_vmem [thread:$0]  %s0, 128, %s17, [#allocation3]
    $region5: #{tpu_custom_call.1} parent=1 // pred_fallthru
      _
    // Predicated region
    $region6: #{tpu_custom_call.1} parent=1 // pred_check
      _
    $region7: #{tpu_custom_call.1} parent=1 // pred_check_branch
      %21 = sbr.rel (0) target = $region9
    $region8: #{tpu_custom_call.1} parent=1 // pred_region
      %s23 = ssub.s32 128, 128
      %24 = vsyncadd [#allocation6], %s23
      %s26 = sshll.u32 [#allocation5], 4
      %s27 = int_to_ptr.vmem [resolvable:$true] %s26
      %29 = dma.hbm_to_vmem [thread:$0]  %s1, 128, %s27, [#allocation6]
    $region9: #{tpu_custom_call.1} parent=1 // pred_fallthru
      _
    // Predicated region
    $region10: #{tpu_custom_call.1} parent=1 // pred_check
      _
    $region11: #{tpu_custom_call.1} parent=1 // pred_check_branch
      %31 = sbr.rel (0) target = $region13
    $region12: #{tpu_custom_call.1} parent=1 // pred_region
      %32 = dma.done [#allocation3], 128
    $region13: #{tpu_custom_call.1} parent=1 // pred_fallthru
      _
    // Predicated region
    $region14: #{tpu_custom_call.1} parent=1 // pred_check
      _
    $region15: #{tpu_custom_call.1} parent=1 // pred_check_branch
      %34 = sbr.rel (0) target = $region17
    $region16: #{tpu_custom_call.1} parent=1 // pred_region
      %35 = dma.done [#allocation6], 128
    $region17: #{tpu_custom_call.1} parent=1 // pred_fallthru
      _
    %v36 = vld [vmem:[#allocation2] sm:$0xff]
    %v37 = vld [vmem:[#allocation5] sm:$0xff]
    %vm38 = vcmp.ge.u32.totalorder %v37, 2147483648
    %v39 = vmul.f32 %v36, 2.0
    %v40 = vsel %vm38, %v39, 0.0
    %41 = vst [vmem:[#allocation7] sm:$0xff] %v40
    // Predicated region
    $region18: #{tpu_custom_call.1} parent=1 // pred_check
      _
    $region19: #{tpu_custom_call.1} parent=1 // pred_check_branch
      %43 = sbr.rel (0) target = $region21
    $region20: #{tpu_custom_call.1} parent=1 // pred_region
      %s45 = ssub.s32 128, 128
      %46 = vsyncadd [#allocation4], %s45
      %s48 = sshll.u32 [#allocation7], 4
      %s49 = int_to_ptr.vmem [resolvable:$true] %s48
      %51 = dma.vmem_to_hbm [thread:$0]  %s49, 128, %s2, [#allocation4]
    $region21: #{tpu_custom_call.1} parent=1 // pred_fallthru
      _
    // Predicated region
    $region22: #{tpu_custom_call.1} parent=1 // pred_check
      _
    $region23: #{tpu_custom_call.1} parent=1 // pred_check_branch
      %53 = sbr.rel (0) target = $region25
    $region24: #{tpu_custom_call.1} parent=1 // pred_region
      %54 = dma.done [#allocation4], 128
    $region25: #{tpu_custom_call.1} parent=1 // pred_fallthru
      _
    %55 = vsyncpa [#allocation3], 1
    %56 = vsyncpa [#allocation6], 1
    %57 = vsyncpa [#allocation4], 1

</llo_original>
